<compile_context>
chip_gen: v6e
topology: v6e:2x2x1
jax: 0.10.0
libtpu: 0.0.40
codegen_flags: <defaults>
</compile_context>

<pallas_src>
import jax
import jax.numpy as jnp
from jax.experimental import pallas as pl
from jax.experimental.pallas import tpu as pltpu

OUT_PAD = 128  # lane-dense width for the 1-wide Q output


def _round_up(x: int, m: int) -> int:
    return ((x + m - 1) // m) * m


def _twinq_kernel(s_ref, a_ref,
                  w1s1_ref, w1a1_ref, b11_ref, w21_ref, b21_ref, w31_ref, b31_ref,
                  w1s2_ref, w1a2_ref, b12_ref, w22_ref, b22_ref, w32_ref, b32_ref,
                  out_ref):
    s = s_ref[...]
    a = a_ref[...]

    def q_head(w1s_ref, w1a_ref, b1_ref, w2_ref, b2_ref, w3_ref, b3_ref):
        wdt = w1s_ref.dtype  # f32 or bf16 matmul inputs; accumulate in f32
        # Layer 1: sa @ W1 expressed as s @ W1s + a @ W1a (no in-kernel concat).
        h = jnp.dot(s.astype(wdt), w1s_ref[...],
                    preferred_element_type=jnp.float32)
        h = h + jnp.dot(a.astype(wdt), w1a_ref[...],
                        preferred_element_type=jnp.float32)
        h = jnp.maximum(h + b1_ref[...], 0.0)
        # Layer 2
        h = jnp.dot(h.astype(wdt), w2_ref[...],
                    preferred_element_type=jnp.float32)
        h = jnp.maximum(h + b2_ref[...], 0.0)
        # Layer 3 (zero-padded to 128 lanes; real Q value lives in lane 0)
        q = jnp.dot(h.astype(wdt), w3_ref[...],
                    preferred_element_type=jnp.float32)
        return q + b3_ref[...]                      # (tm, OUT_PAD)

    q1 = q_head(w1s1_ref, w1a1_ref, b11_ref, w21_ref, b21_ref, w31_ref, b31_ref)
    q2 = q_head(w1s2_ref, w1a2_ref, b12_ref, w22_ref, b22_ref, w32_ref, b32_ref)
    out_ref[...] = jnp.minimum(q1, q2).astype(out_ref.dtype)


def twinq_forward(state, action, params, *, tm_max=512,
                  weight_dtype=jnp.float32):
    """TwinQ.forward: min(q1(sa), q2(sa)). Returns shape [B] float32.

    state:  [B, state_dim] f32;  action: [B, action_dim] f32
    params: {"q1": {w1,b1,w2,b2,w3,b3}, "q2": {...}} with W as [in, out].
    weight_dtype: set to jnp.bfloat16 on v6e/v7x to halve weight DMA
                  (f32 accumulation keeps accuracy).
    """
    B, state_dim = state.shape
    action_dim = action.shape[1]

    # Batch tiling: tm rows per grid step (multiple of 8 sublanes, <= tm_max).
    tm = min(tm_max, _round_up(B, 8))
    B_pad = _round_up(B, tm)
    if B_pad != B:
        state = jnp.pad(state, ((0, B_pad - B), (0, 0)))
        action = jnp.pad(action, ((0, B_pad - B), (0, 0)))

    def prep_head(p):
        w1, b1 = p["w1"], p["b1"]
        w2, b2 = p["w2"], p["b2"]
        w3, b3 = p["w3"], p["b3"]
        # Split first layer so the kernel never concatenates state/action.
        w1s = w1[:state_dim].astype(weight_dtype)
        w1a = w1[state_dim:].astype(weight_dtype)
        # Zero-pad the final layer to a lane-dense 128-wide output slab.
        w3p = jnp.pad(w3, ((0, 0), (0, OUT_PAD - w3.shape[1]))).astype(weight_dtype)
        b3p = jnp.pad(b3, ((0, 0), (0, OUT_PAD - b3.shape[1])))
        return (w1s, w1a, b1, w2.astype(weight_dtype), b2, w3p, b3p)

    head1 = prep_head(params["q1"])
    head2 = prep_head(params["q2"])

    # Tiled (per-grid-step) specs for the batch-major tensors.
    def row_spec(x):
        return pl.BlockSpec((tm, x.shape[1]), lambda i: (i, 0))

    # Weights/biases: fetched once, VMEM-resident across all grid steps.
    def resident_spec(x):
        return pl.BlockSpec(x.shape, lambda i: (0, 0))

    in_specs = ([row_spec(state), row_spec(action)]
                + [resident_spec(x) for x in head1]
                + [resident_spec(x) for x in head2])

    out_full = pl.pallas_call(
        _twinq_kernel,
        out_shape=jax.ShapeDtypeStruct((B_pad, OUT_PAD), jnp.float32),
        grid=(B_pad // tm,),
        in_specs=in_specs,
        out_specs=pl.BlockSpec((tm, OUT_PAD), lambda i: (i, 0)),
        compiler_params=pltpu.CompilerParams(
            dimension_semantics=("parallel",)),
    )(state, action, *head1, *head2)

    # Lane 0 holds the real Q value; drop padded rows and padding lanes.
    return out_full[:B, 0]


def init_params(key, state_dim, action_dim, hidden_dim):
    """nn.Linear-style init: U(-1/sqrt(fan_in), 1/sqrt(fan_in)).

    Weights are stored as [in, out] (transposed vs. PyTorch); biases are 2-D
    ([1, out]) so they map cleanly onto (sublane, lane).
    """
    sa_dim = state_dim + action_dim
    dims = [(sa_dim, hidden_dim), (hidden_dim, hidden_dim), (hidden_dim, 1)]

    def init_head(k):
        ks = jax.random.split(k, 2 * len(dims))
        p = {}
        for li, (fan_in, fan_out) in enumerate(dims):
            bound = 1.0 / (fan_in ** 0.5)
            p[f"w{li + 1}"] = jax.random.uniform(
                ks[2 * li], (fan_in, fan_out), jnp.float32, -bound, bound)
            p[f"b{li + 1}"] = jax.random.uniform(
                ks[2 * li + 1], (1, fan_out), jnp.float32, -bound, bound)
        return p

    k1, k2 = jax.random.split(key)
    return {"q1": init_head(k1), "q2": init_head(k2)}


def twinq_reference(state, action, params):
    """Pure-JAX reference of the same math (PyTorch TwinQ.forward)."""
    sa = jnp.concatenate([state, action], axis=1)

    def mlp(p):
        h = jnp.maximum(sa @ p["w1"] + p["b1"], 0.0)
        h = jnp.maximum(h @ p["w2"] + p["b2"], 0.0)
        return (h @ p["w3"] + p["b3"])[:, 0]

    return jnp.minimum(mlp(params["q1"]), mlp(params["q2"]))


if __name__ == "__main__":
    # Small shapes consistent with TwinQ.forward(state, action).
    B, state_dim, action_dim, hidden_dim = 10, 16, 6, 32

    key = jax.random.PRNGKey(0)
    k_s, k_a, k_p = jax.random.split(key, 3)
    state = jax.random.normal(k_s, (B, state_dim), dtype=jnp.float32)
    action = jax.random.normal(k_a, (B, action_dim), dtype=jnp.float32)
    params = init_params(k_p, state_dim, action_dim, hidden_dim)

    out = twinq_forward(state, action, params)   # f32 path -> exact vs. ref
    out = jax.block_until_ready(out)

    ref = twinq_reference(state, action, params)
    assert out.shape == (B,)
    assert jnp.allclose(out, ref, atol=1e-5, rtol=1e-5), \
        float(jnp.max(jnp.abs(out - ref)))

    print("KERNEL_OK")
</pallas_src>

<mosaic_0001>
module attributes {stable_mosaic.version = 11 : i64} {
  func.func @_twinq_kernel(%arg0: i32, %arg1: memref<16x16xf32, #tpu.memory_space<vmem>>, %arg2: memref<16x6xf32, #tpu.memory_space<vmem>>, %arg3: memref<16x32xf32, #tpu.memory_space<vmem>>, %arg4: memref<6x32xf32, #tpu.memory_space<vmem>>, %arg5: memref<1x32xf32, #tpu.memory_space<vmem>>, %arg6: memref<32x32xf32, #tpu.memory_space<vmem>>, %arg7: memref<1x32xf32, #tpu.memory_space<vmem>>, %arg8: memref<32x128xf32, #tpu.memory_space<vmem>>, %arg9: memref<1x128xf32, #tpu.memory_space<vmem>>, %arg10: memref<16x32xf32, #tpu.memory_space<vmem>>, %arg11: memref<6x32xf32, #tpu.memory_space<vmem>>, %arg12: memref<1x32xf32, #tpu.memory_space<vmem>>, %arg13: memref<32x32xf32, #tpu.memory_space<vmem>>, %arg14: memref<1x32xf32, #tpu.memory_space<vmem>>, %arg15: memref<32x128xf32, #tpu.memory_space<vmem>>, %arg16: memref<1x128xf32, #tpu.memory_space<vmem>>, %arg17: memref<16x128xf32, #tpu.memory_space<vmem>>) attributes {dimension_semantics = [#tpu.dimension_semantics<parallel>], iteration_bounds = array<i64: 1>, scalar_prefetch = 0 : i64, scratch_operands = 0 : i64, tpu.core_type = #tpu.core_type<tc>, window_params = [{transform_indices = @transform_0, window_bounds = array<i64: 16, 16>}, {transform_indices = @transform_1, window_bounds = array<i64: 16, 6>}, {pipeline_mode = #tpu.pipeline_mode<synchronous>, transform_indices = @transform_2, window_bounds = array<i64: 16, 32>}, {pipeline_mode = #tpu.pipeline_mode<synchronous>, transform_indices = @transform_3, window_bounds = array<i64: 6, 32>}, {pipeline_mode = #tpu.pipeline_mode<synchronous>, transform_indices = @transform_4, window_bounds = array<i64: 1, 32>}, {pipeline_mode = #tpu.pipeline_mode<synchronous>, transform_indices = @transform_5, window_bounds = array<i64: 32, 32>}, {pipeline_mode = #tpu.pipeline_mode<synchronous>, transform_indices = @transform_6, window_bounds = array<i64: 1, 32>}, {pipeline_mode = #tpu.pipeline_mode<synchronous>, transform_indices = @transform_7, window_bounds = array<i64: 32, 128>}, {pipeline_mode = #tpu.pipeline_mode<synchronous>, transform_indices = @transform_8, window_bounds = array<i64: 1, 128>}, {pipeline_mode = #tpu.pipeline_mode<synchronous>, transform_indices = @transform_9, window_bounds = array<i64: 16, 32>}, {pipeline_mode = #tpu.pipeline_mode<synchronous>, transform_indices = @transform_10, window_bounds = array<i64: 6, 32>}, {pipeline_mode = #tpu.pipeline_mode<synchronous>, transform_indices = @transform_11, window_bounds = array<i64: 1, 32>}, {pipeline_mode = #tpu.pipeline_mode<synchronous>, transform_indices = @transform_12, window_bounds = array<i64: 32, 32>}, {pipeline_mode = #tpu.pipeline_mode<synchronous>, transform_indices = @transform_13, window_bounds = array<i64: 1, 32>}, {pipeline_mode = #tpu.pipeline_mode<synchronous>, transform_indices = @transform_14, window_bounds = array<i64: 32, 128>}, {pipeline_mode = #tpu.pipeline_mode<synchronous>, transform_indices = @transform_15, window_bounds = array<i64: 1, 128>}, {transform_indices = @transform_16, window_bounds = array<i64: 16, 128>}]} {
    %c0 = arith.constant 0 : index
    %c0_0 = arith.constant 0 : index
    %0 = vector.load %arg1[%c0, %c0_0] : memref<16x16xf32, #tpu.memory_space<vmem>>, vector<16x16xf32>
    %c0_1 = arith.constant 0 : index
    %c0_2 = arith.constant 0 : index
    %1 = vector.load %arg2[%c0_1, %c0_2] : memref<16x6xf32, #tpu.memory_space<vmem>>, vector<16x6xf32>
    %c0_3 = arith.constant 0 : index
    %c0_4 = arith.constant 0 : index
    %2 = vector.load %arg3[%c0_3, %c0_4] : memref<16x32xf32, #tpu.memory_space<vmem>>, vector<16x32xf32>
    %cst = arith.constant dense<0.000000e+00> : vector<16x32xf32>
    %3 = tpu.matmul %0, %2, %cst {dimension_numbers = #tpu.dot_dimension_numbers<[1], [0], [0], [1], [0, 0, 1, 1], [], []>} : vector<16x16xf32>, vector<16x32xf32>, vector<16x32xf32> -> vector<16x32xf32>
    %c0_5 = arith.constant 0 : index
    %c0_6 = arith.constant 0 : index
    %4 = vector.load %arg4[%c0_5, %c0_6] : memref<6x32xf32, #tpu.memory_space<vmem>>, vector<6x32xf32>
    %cst_7 = arith.constant dense<0.000000e+00> : vector<16x32xf32>
    %5 = tpu.matmul %1, %4, %cst_7 {dimension_numbers = #tpu.dot_dimension_numbers<[1], [0], [0], [1], [0, 0, 1, 1], [], []>} : vector<16x6xf32>, vector<6x32xf32>, vector<16x32xf32> -> vector<16x32xf32>
    %6 = arith.addf %3, %5 : vector<16x32xf32>
    %c0_8 = arith.constant 0 : index
    %c0_9 = arith.constant 0 : index
    %7 = vector.load %arg5[%c0_8, %c0_9] : memref<1x32xf32, #tpu.memory_space<vmem>>, vector<1x32xf32>
    %8 = vector.broadcast %7 : vector<1x32xf32> to vector<16x32xf32>
    %9 = arith.addf %6, %8 : vector<16x32xf32>
    %cst_10 = arith.constant 0.000000e+00 : f32
    %10 = vector.broadcast %cst_10 : f32 to vector<16x32xf32>
    %11 = arith.maximumf %9, %10 : vector<16x32xf32>
    %c0_11 = arith.constant 0 : index
    %c0_12 = arith.constant 0 : index
    %12 = vector.load %arg6[%c0_11, %c0_12] : memref<32x32xf32, #tpu.memory_space<vmem>>, vector<32x32xf32>
    %cst_13 = arith.constant dense<0.000000e+00> : vector<16x32xf32>
    %13 = tpu.matmul %11, %12, %cst_13 {dimension_numbers = #tpu.dot_dimension_numbers<[1], [0], [0], [1], [0, 0, 1, 1], [], []>} : vector<16x32xf32>, vector<32x32xf32>, vector<16x32xf32> -> vector<16x32xf32>
    %c0_14 = arith.constant 0 : index
    %c0_15 = arith.constant 0 : index
    %14 = vector.load %arg7[%c0_14, %c0_15] : memref<1x32xf32, #tpu.memory_space<vmem>>, vector<1x32xf32>
    %15 = vector.broadcast %14 : vector<1x32xf32> to vector<16x32xf32>
    %16 = arith.addf %13, %15 : vector<16x32xf32>
    %cst_16 = arith.constant 0.000000e+00 : f32
    %17 = vector.broadcast %cst_16 : f32 to vector<16x32xf32>
    %18 = arith.maximumf %16, %17 : vector<16x32xf32>
    %c0_17 = arith.constant 0 : index
    %c0_18 = arith.constant 0 : index
    %19 = vector.load %arg8[%c0_17, %c0_18] : memref<32x128xf32, #tpu.memory_space<vmem>>, vector<32x128xf32>
    %cst_19 = arith.constant dense<0.000000e+00> : vector<16x128xf32>
    %20 = tpu.matmul %18, %19, %cst_19 {dimension_numbers = #tpu.dot_dimension_numbers<[1], [0], [0], [1], [0, 0, 1, 1], [], []>} : vector<16x32xf32>, vector<32x128xf32>, vector<16x128xf32> -> vector<16x128xf32>
    %c0_20 = arith.constant 0 : index
    %c0_21 = arith.constant 0 : index
    %21 = vector.load %arg9[%c0_20, %c0_21] : memref<1x128xf32, #tpu.memory_space<vmem>>, vector<1x128xf32>
    %22 = vector.broadcast %21 : vector<1x128xf32> to vector<16x128xf32>
    %23 = arith.addf %20, %22 : vector<16x128xf32>
    %c0_22 = arith.constant 0 : index
    %c0_23 = arith.constant 0 : index
    %24 = vector.load %arg10[%c0_22, %c0_23] : memref<16x32xf32, #tpu.memory_space<vmem>>, vector<16x32xf32>
    %cst_24 = arith.constant dense<0.000000e+00> : vector<16x32xf32>
    %25 = tpu.matmul %0, %24, %cst_24 {dimension_numbers = #tpu.dot_dimension_numbers<[1], [0], [0], [1], [0, 0, 1, 1], [], []>} : vector<16x16xf32>, vector<16x32xf32>, vector<16x32xf32> -> vector<16x32xf32>
    %c0_25 = arith.constant 0 : index
    %c0_26 = arith.constant 0 : index
    %26 = vector.load %arg11[%c0_25, %c0_26] : memref<6x32xf32, #tpu.memory_space<vmem>>, vector<6x32xf32>
    %cst_27 = arith.constant dense<0.000000e+00> : vector<16x32xf32>
    %27 = tpu.matmul %1, %26, %cst_27 {dimension_numbers = #tpu.dot_dimension_numbers<[1], [0], [0], [1], [0, 0, 1, 1], [], []>} : vector<16x6xf32>, vector<6x32xf32>, vector<16x32xf32> -> vector<16x32xf32>
    %28 = arith.addf %25, %27 : vector<16x32xf32>
    %c0_28 = arith.constant 0 : index
    %c0_29 = arith.constant 0 : index
    %29 = vector.load %arg12[%c0_28, %c0_29] : memref<1x32xf32, #tpu.memory_space<vmem>>, vector<1x32xf32>
    %30 = vector.broadcast %29 : vector<1x32xf32> to vector<16x32xf32>
    %31 = arith.addf %28, %30 : vector<16x32xf32>
    %cst_30 = arith.constant 0.000000e+00 : f32
    %32 = vector.broadcast %cst_30 : f32 to vector<16x32xf32>
    %33 = arith.maximumf %31, %32 : vector<16x32xf32>
    %c0_31 = arith.constant 0 : index
    %c0_32 = arith.constant 0 : index
    %34 = vector.load %arg13[%c0_31, %c0_32] : memref<32x32xf32, #tpu.memory_space<vmem>>, vector<32x32xf32>
    %cst_33 = arith.constant dense<0.000000e+00> : vector<16x32xf32>
    %35 = tpu.matmul %33, %34, %cst_33 {dimension_numbers = #tpu.dot_dimension_numbers<[1], [0], [0], [1], [0, 0, 1, 1], [], []>} : vector<16x32xf32>, vector<32x32xf32>, vector<16x32xf32> -> vector<16x32xf32>
    %c0_34 = arith.constant 0 : index
    %c0_35 = arith.constant 0 : index
    %36 = vector.load %arg14[%c0_34, %c0_35] : memref<1x32xf32, #tpu.memory_space<vmem>>, vector<1x32xf32>
    %37 = vector.broadcast %36 : vector<1x32xf32> to vector<16x32xf32>
    %38 = arith.addf %35, %37 : vector<16x32xf32>
    %cst_36 = arith.constant 0.000000e+00 : f32
    %39 = vector.broadcast %cst_36 : f32 to vector<16x32xf32>
    %40 = arith.maximumf %38, %39 : vector<16x32xf32>
    %c0_37 = arith.constant 0 : index
    %c0_38 = arith.constant 0 : index
    %41 = vector.load %arg15[%c0_37, %c0_38] : memref<32x128xf32, #tpu.memory_space<vmem>>, vector<32x128xf32>
    %cst_39 = arith.constant dense<0.000000e+00> : vector<16x128xf32>
    %42 = tpu.matmul %40, %41, %cst_39 {dimension_numbers = #tpu.dot_dimension_numbers<[1], [0], [0], [1], [0, 0, 1, 1], [], []>} : vector<16x32xf32>, vector<32x128xf32>, vector<16x128xf32> -> vector<16x128xf32>
    %c0_40 = arith.constant 0 : index
    %c0_41 = arith.constant 0 : index
    %43 = vector.load %arg16[%c0_40, %c0_41] : memref<1x128xf32, #tpu.memory_space<vmem>>, vector<1x128xf32>
    %44 = vector.broadcast %43 : vector<1x128xf32> to vector<16x128xf32>
    %45 = arith.addf %42, %44 : vector<16x128xf32>
    %46 = arith.minimumf %23, %45 : vector<16x128xf32>
    %c0_42 = arith.constant 0 : index
    %c0_43 = arith.constant 0 : index
    %47 = vector.load %arg17[%c0_42, %c0_43] : memref<16x128xf32, #tpu.memory_space<vmem>>, vector<16x128xf32>
    tpu.vector_store %arg17[%c0_42, %c0_43], %46 {strides = array<i32>} : memref<16x128xf32, #tpu.memory_space<vmem>>, vector<16x128xf32>,
    return
  }
  func.func @transform_0(%arg0: i32) -> (i32, i32) {
    %c0_i32 = arith.constant 0 : i32
    %c0_i32_0 = arith.constant 0 : i32
    return %arg0, %c0_i32 : i32, i32
  }
  func.func @transform_1(%arg0: i32) -> (i32, i32) {
    %c0_i32 = arith.constant 0 : i32
    %c0_i32_0 = arith.constant 0 : i32
    return %arg0, %c0_i32 : i32, i32
  }
  func.func @transform_2(%arg0: i32) -> (i32, i32) {
    %c0_i32 = arith.constant 0 : i32
    %c0_i32_0 = arith.constant 0 : i32
    %c0_i32_1 = arith.constant 0 : i32
    return %c0_i32, %c0_i32_0 : i32, i32
  }
  func.func @transform_3(%arg0: i32) -> (i32, i32) {
    %c0_i32 = arith.constant 0 : i32
    %c0_i32_0 = arith.constant 0 : i32
    %c0_i32_1 = arith.constant 0 : i32
    return %c0_i32, %c0_i32_0 : i32, i32
  }
  func.func @transform_4(%arg0: i32) -> (i32, i32) {
    %c0_i32 = arith.constant 0 : i32
    %c0_i32_0 = arith.constant 0 : i32
    %c0_i32_1 = arith.constant 0 : i32
    return %c0_i32, %c0_i32_0 : i32, i32
  }
  func.func @transform_5(%arg0: i32) -> (i32, i32) {
    %c0_i32 = arith.constant 0 : i32
    %c0_i32_0 = arith.constant 0 : i32
    %c0_i32_1 = arith.constant 0 : i32
    return %c0_i32, %c0_i32_0 : i32, i32
  }
  func.func @transform_6(%arg0: i32) -> (i32, i32) {
    %c0_i32 = arith.constant 0 : i32
    %c0_i32_0 = arith.constant 0 : i32
    %c0_i32_1 = arith.constant 0 : i32
    return %c0_i32, %c0_i32_0 : i32, i32
  }
  func.func @transform_7(%arg0: i32) -> (i32, i32) {
    %c0_i32 = arith.constant 0 : i32
    %c0_i32_0 = arith.constant 0 : i32
    %c0_i32_1 = arith.constant 0 : i32
    return %c0_i32, %c0_i32_0 : i32, i32
  }
  func.func @transform_8(%arg0: i32) -> (i32, i32) {
    %c0_i32 = arith.constant 0 : i32
    %c0_i32_0 = arith.constant 0 : i32
    %c0_i32_1 = arith.constant 0 : i32
    return %c0_i32, %c0_i32_0 : i32, i32
  }
  func.func @transform_9(%arg0: i32) -> (i32, i32) {
    %c0_i32 = arith.constant 0 : i32
    %c0_i32_0 = arith.constant 0 : i32
    %c0_i32_1 = arith.constant 0 : i32
    return %c0_i32, %c0_i32_0 : i32, i32
  }
  func.func @transform_10(%arg0: i32) -> (i32, i32) {
    %c0_i32 = arith.constant 0 : i32
    %c0_i32_0 = arith.constant 0 : i32
    %c0_i32_1 = arith.constant 0 : i32
    return %c0_i32, %c0_i32_0 : i32, i32
  }
  func.func @transform_11(%arg0: i32) -> (i32, i32) {
    %c0_i32 = arith.constant 0 : i32
    %c0_i32_0 = arith.constant 0 : i32
    %c0_i32_1 = arith.constant 0 : i32
    return %c0_i32, %c0_i32_0 : i32, i32
  }
  func.func @transform_12(%arg0: i32) -> (i32, i32) {
    %c0_i32 = arith.constant 0 : i32
    %c0_i32_0 = arith.constant 0 : i32
    %c0_i32_1 = arith.constant 0 : i32
    return %c0_i32, %c0_i32_0 : i32, i32
  }
  func.func @transform_13(%arg0: i32) -> (i32, i32) {
    %c0_i32 = arith.constant 0 : i32
    %c0_i32_0 = arith.constant 0 : i32
    %c0_i32_1 = arith.constant 0 : i32
    return %c0_i32, %c0_i32_0 : i32, i32
  }
  func.func @transform_14(%arg0: i32) -> (i32, i32) {
    %c0_i32 = arith.constant 0 : i32
    %c0_i32_0 = arith.constant 0 : i32
    %c0_i32_1 = arith.constant 0 : i32
    return %c0_i32, %c0_i32_0 : i32, i32
  }
  func.func @transform_15(%arg0: i32) -> (i32, i32) {
    %c0_i32 = arith.constant 0 : i32
    %c0_i32_0 = arith.constant 0 : i32
    %c0_i32_1 = arith.constant 0 : i32
    return %c0_i32, %c0_i32_0 : i32, i32
  }
  func.func @transform_16(%arg0: i32) -> (i32, i32) {
    %c0_i32 = arith.constant 0 : i32
    %c0_i32_0 = arith.constant 0 : i32
    return %arg0, %c0_i32 : i32, i32
  }
}

</mosaic_0001>

<llo_original>
// kernel: tpu_custom_call.1
$region0: #{tpu_custom_call.1}
  #allocation0 [shape = 'u32[]', space=smem, size = 0x4, offset = 0x4, fixed_abs, tag = 'smem constant byte address 0x4 - core index']
  #allocation1 [shape = 'u32[144,128]{1,0:T(1,128)}', space=vmem, size = 0x12000, scoped, tag = 'internal scratch']
  %s0 = inlined_call_operand.hbm [shape: f32[16,16], index: 0, kind: input, shape index: {}]
  %s1 = inlined_call_operand.vmem [shape: f32[16,6], index: 1, kind: input, shape index: {}]
  %s2 = inlined_call_operand.hbm [shape: f32[16,32], index: 2, kind: input, shape index: {}]
  %s3 = inlined_call_operand.hbm [shape: f32[6,32], index: 3, kind: input, shape index: {}]
  %s4 = inlined_call_operand.hbm [shape: f32[1,32], index: 4, kind: input, shape index: {}]
  %s5 = inlined_call_operand.vmem [shape: f32[32,32], index: 5, kind: input, shape index: {}]
  %s6 = inlined_call_operand.hbm [shape: f32[1,32], index: 6, kind: input, shape index: {}]
  %s7 = inlined_call_operand.hbm [shape: f32[32,128], index: 7, kind: input, shape index: {}]
  %s8 = inlined_call_operand.hbm [shape: f32[1,128], index: 8, kind: input, shape index: {}]
  %s9 = inlined_call_operand.hbm [shape: f32[16,32], index: 9, kind: input, shape index: {}]
  %s10 = inlined_call_operand.vmem [shape: f32[6,32], index: 10, kind: input, shape index: {}]
  %s11 = inlined_call_operand.vmem [shape: f32[1,32], index: 11, kind: input, shape index: {}]
  %s12 = inlined_call_operand.hbm [shape: f32[32,32], index: 12, kind: input, shape index: {}]
  %s13 = inlined_call_operand.vmem [shape: f32[1,32], index: 13, kind: input, shape index: {}]
  %s14 = inlined_call_operand.hbm [shape: f32[32,128], index: 14, kind: input, shape index: {}]
  %s15 = inlined_call_operand.vmem [shape: f32[1,128], index: 15, kind: input, shape index: {}]
  %s16 = inlined_call_operand.hbm [shape: f32[16,128], index: 16, kind: output, shape index: {}]
  %s17 = sld [smem:[#allocation0]]
  $region114: #{tpu_custom_call.1} parent=0
    _
  %s19 = ssub.s32 1, %s17
  %s20 = scalar_select 0, %s19, %s17
  $region1: #{tpu_custom_call.1} parent=0
    #allocation2 [shape = 'u8[8192]{0}', space=vmem, size = 0x2000, scoped, tag = 'input window, operand 0, single buffered']
    #allocation3 [shape = 's32[1]{0}', space=sflag, size = 0x4, scoped, tag = 'scoped memory for tpu_custom_call.1']
    #allocation4 [shape = 's32[1]{0}', space=sflag, size = 0x4, scoped, tag = 'scoped memory for tpu_custom_call.1']
    #allocation5 [shape = 'u8[8192]{0}', space=vmem, size = 0x2000, scoped, tag = 'input window, operand 2, single buffered']
    #allocation6 [shape = 's32[1]{0}', space=sflag, size = 0x4, scoped, tag = 'scoped memory for tpu_custom_call.1']
    #allocation7 [shape = 'u8[4096]{0}', space=vmem, size = 0x1000, scoped, tag = 'input window, operand 3, single buffered']
    #allocation8 [shape = 'u8[512]{0}', space=vmem, size = 0x400, scoped, tag = 'input window, operand 4, single buffered']
    #allocation9 [shape = 's32[1]{0}', space=sflag, size = 0x4, scoped, tag = 'scoped memory for tpu_custom_call.1']
    #allocation10 [shape = 'u8[512]{0}', space=vmem, size = 0x400, scoped, tag = 'input window, operand 6, single buffered']
    #allocation11 [shape = 'u8[16384]{0}', space=vmem, size = 0x4000, scoped, tag = 'input window, operand 7, single buffered']
    #allocation12 [shape = 's32[1]{0}', space=sflag, size = 0x4, scoped, tag = 'scoped memory for tpu_custom_call.1']
    #allocation13 [shape = 'u8[512]{0}', space=vmem, size = 0x400, scoped, tag = 'input window, operand 8, single buffered']
    #allocation14 [shape = 'u8[8192]{0}', space=vmem, size = 0x2000, scoped, tag = 'input window, operand 9, single buffered']
    #allocation15 [shape = 's32[1]{0}', space=sflag, size = 0x4, scoped, tag = 'scoped memory for tpu_custom_call.1']
    #allocation16 [shape = 'u8[16384]{0}', space=vmem, size = 0x4000, scoped, tag = 'input window, operand 12, single buffered']
    #allocation17 [shape = 'u8[16384]{0}', space=vmem, size = 0x4000, scoped, tag = 'input window, operand 14, single buffered']
    #allocation18 [shape = 's32[1]{0}', space=sflag, size = 0x4, scoped, tag = 'scoped memory for tpu_custom_call.1']
    #allocation19 [shape = 'u8[8192]{0}', space=vmem, size = 0x2000, scoped, tag = 'output window, operand 0, single buffered']
    %21 = vsyncpa [#allocation3], 0
    %22 = vsyncpa [#allocation6], 0
    %23 = vsyncpa [#allocation9], 0
    %24 = vsyncpa [#allocation12], 0
    %25 = vsyncpa [#allocation15], 0
    %26 = vsyncpa [#allocation18], 0
    %27 = vsyncpa [#allocation4], 0
    // Predicated region
    $region2: #{tpu_custom_call.1} parent=1 // pred_check
      _
    $region3: #{tpu_custom_call.1} parent=1 // pred_check_branch
      %29 = sbr.rel (0) target = $region5
    $region4: #{tpu_custom_call.1} parent=1 // pred_region
      %s31 = ssub.s32 256, 256
      %32 = vsyncadd [#allocation3], %s31
      %s33 = sshll.u32 [#allocation2], 4
      %s34 = int_to_ptr.vmem [resolvable:$true] %s33
      %39 = dma.hbm_to_vmem [thread:$0]  %s0, 256, %s34, [#allocation3], 128, 128, 8
    $region5: #{tpu_custom_call.1} parent=1 // pred_fallthru
      _
    // Predicated region
    $region6: #{tpu_custom_call.1} parent=1 // pred_check
      _
    $region7: #{tpu_custom_call.1} parent=1 // pred_check_branch
      %41 = sbr.rel (0) target = $region9
    $region8: #{tpu_custom_call.1} parent=1 // pred_region
      _
    $region9: #{tpu_custom_call.1} parent=1 // pred_fallthru
      _
    // Predicated region
    $region10: #{tpu_custom_call.1} parent=1 // pred_check
      _
    $region11: #{tpu_custom_call.1} parent=1 // pred_check_branch
      %43 = sbr.rel (0) target = $region13
    $region12: #{tpu_custom_call.1} parent=1 // pred_region
      %s45 = ssub.s32 256, 256
      %46 = vsyncadd [#allocation6], %s45
      %s47 = sshll.u32 [#allocation5], 4
      %s48 = int_to_ptr.vmem [resolvable:$true] %s47
      %53 = dma.hbm_to_vmem [thread:$0]  %s2, 256, %s48, [#allocation6], 128, 128, 8
    $region13: #{tpu_custom_call.1} parent=1 // pred_fallthru
      _
    // Predicated region
    $region14: #{tpu_custom_call.1} parent=1 // pred_check
      _
    $region15: #{tpu_custom_call.1} parent=1 // pred_check_branch
      %55 = sbr.rel (0) target = $region17
    $region16: #{tpu_custom_call.1} parent=1 // pred_region
      %s57 = ssub.s32 128, 128
      %58 = vsyncadd [#allocation6], %s57
      %s60 = sshll.u32 [#allocation7], 4
      %s61 = int_to_ptr.vmem [resolvable:$true] %s60
      %63 = dma.hbm_to_vmem [thread:$0]  %s3, 128, %s61, [#allocation6]
    $region17: #{tpu_custom_call.1} parent=1 // pred_fallthru
      _
    // Predicated region
    $region18: #{tpu_custom_call.1} parent=1 // pred_check
      _
    $region19: #{tpu_custom_call.1} parent=1 // pred_check_branch
      %65 = sbr.rel (0) target = $region21
    $region20: #{tpu_custom_call.1} parent=1 // pred_region
      %s67 = ssub.s32 16, 16
      %68 = vsyncadd [#allocation9], %s67
      %s70 = sshll.u32 [#allocation8], 4
      %s71 = int_to_ptr.vmem [resolvable:$true] %s70
      %73 = dma.hbm_to_vmem [thread:$0]  %s4, 16, %s71, [#allocation9]
    $region21: #{tpu_custom_call.1} parent=1 // pred_fallthru
      _
    // Predicated region
    $region22: #{tpu_custom_call.1} parent=1 // pred_check
      _
    $region23: #{tpu_custom_call.1} parent=1 // pred_check_branch
      %75 = sbr.rel (0) target = $region25
    $region24: #{tpu_custom_call.1} parent=1 // pred_region
      _
    $region25: #{tpu_custom_call.1} parent=1 // pred_fallthru
      _
    // Predicated region
    $region26: #{tpu_custom_call.1} parent=1 // pred_check
      _
    $region27: #{tpu_custom_call.1} parent=1 // pred_check_branch
      %77 = sbr.rel (0) target = $region29
    $region28: #{tpu_custom_call.1} parent=1 // pred_region
      %s79 = ssub.s32 16, 16
      %80 = vsyncadd [#allocation9], %s79
      %s82 = sshll.u32 [#allocation10], 4
      %s83 = int_to_ptr.vmem [resolvable:$true] %s82
      %85 = dma.hbm_to_vmem [thread:$0]  %s6, 16, %s83, [#allocation9]
    $region29: #{tpu_custom_call.1} parent=1 // pred_fallthru
      _
    // Predicated region
    $region30: #{tpu_custom_call.1} parent=1 // pred_check
      _
    $region31: #{tpu_custom_call.1} parent=1 // pred_check_branch
      %87 = sbr.rel (0) target = $region33
    $region32: #{tpu_custom_call.1} parent=1 // pred_region
      %s89 = ssub.s32 512, 512
      %90 = vsyncadd [#allocation12], %s89
      %s91 = sshll.u32 [#allocation11], 4
      %s92 = int_to_ptr.vmem [resolvable:$true] %s91
      %97 = dma.hbm_to_vmem [thread:$0]  %s7, 512, %s92, [#allocation12], 128, 128, 8
    $region33: #{tpu_custom_call.1} parent=1 // pred_fallthru
      _
    // Predicated region
    $region34: #{tpu_custom_call.1} parent=1 // pred_check
      _
    $region35: #{tpu_custom_call.1} parent=1 // pred_check_branch
      %99 = sbr.rel (0) target = $region37
    $region36: #{tpu_custom_call.1} parent=1 // pred_region
      %s101 = ssub.s32 16, 16
      %102 = vsyncadd [#allocation12], %s101
      %s104 = sshll.u32 [#allocation13], 4
      %s105 = int_to_ptr.vmem [resolvable:$true] %s104
      %107 = dma.hbm_to_vmem [thread:$0]  %s8, 16, %s105, [#allocation12]
    $region37: #{tpu_custom_call.1} parent=1 // pred_fallthru
      _
    // Predicated region
    $region38: #{tpu_custom_call.1} parent=1 // pred_check
      _
    $region39: #{tpu_custom_call.1} parent=1 // pred_check_branch
      %109 = sbr.rel (0) target = $region41
    $region40: #{tpu_custom_call.1} parent=1 // pred_region
      %s111 = ssub.s32 256, 256
      %112 = vsyncadd [#allocation15], %s111
      %s113 = sshll.u32 [#allocation14], 4
      %s114 = int_to_ptr.vmem [resolvable:$true] %s113
      %119 = dma.hbm_to_vmem [thread:$0]  %s9, 256, %s114, [#allocation15], 128, 128, 8
    $region41: #{tpu_custom_call.1} parent=1 // pred_fallthru
      _
    // Predicated region
    $region42: #{tpu_custom_call.1} parent=1 // pred_check
      _
    $region43: #{tpu_custom_call.1} parent=1 // pred_check_branch
      %121 = sbr.rel (0) target = $region45
    $region44: #{tpu_custom_call.1} parent=1 // pred_region
      _
    $region45: #{tpu_custom_call.1} parent=1 // pred_fallthru
      _
    // Predicated region
    $region46: #{tpu_custom_call.1} parent=1 // pred_check
      _
    $region47: #{tpu_custom_call.1} parent=1 // pred_check_branch
      %123 = sbr.rel (0) target = $region49
    $region48: #{tpu_custom_call.1} parent=1 // pred_region
      _
    $region49: #{tpu_custom_call.1} parent=1 // pred_fallthru
      _
    // Predicated region
    $region50: #{tpu_custom_call.1} parent=1 // pred_check
      _
    $region51: #{tpu_custom_call.1} parent=1 // pred_check_branch
      %125 = sbr.rel (0) target = $region53
    $region52: #{tpu_custom_call.1} parent=1 // pred_region
      %s127 = ssub.s32 512, 512
      %128 = vsyncadd [#allocation15], %s127
      %s129 = sshll.u32 [#allocation16], 4
      %s130 = int_to_ptr.vmem [resolvable:$true] %s129
      %135 = dma.hbm_to_vmem [thread:$0]  %s12, 512, %s130, [#allocation15], 128, 128, 8
    $region53: #{tpu_custom_call.1} parent=1 // pred_fallthru
      _
    // Predicated region
    $region54: #{tpu_custom_call.1} parent=1 // pred_check
      _
    $region55: #{tpu_custom_call.1} parent=1 // pred_check_branch
      %137 = sbr.rel (0) target = $region57
    $region56: #{tpu_custom_call.1} parent=1 // pred_region
      _
    $region57: #{tpu_custom_call.1} parent=1 // pred_fallthru
      _
    // Predicated region
    $region58: #{tpu_custom_call.1} parent=1 // pred_check
      _
    $region59: #{tpu_custom_call.1} parent=1 // pred_check_branch
      %139 = sbr.rel (0) target = $region61
    $region60: #{tpu_custom_call.1} parent=1 // pred_region
      %s141 = ssub.s32 512, 512
      %142 = vsyncadd [#allocation18], %s141
      %s143 = sshll.u32 [#allocation17], 4
      %s144 = int_to_ptr.vmem [resolvable:$true] %s143
      %149 = dma.hbm_to_vmem [thread:$0]  %s14, 512, %s144, [#allocation18], 128, 128, 8
    $region61: #{tpu_custom_call.1} parent=1 // pred_fallthru
      _
    // Predicated region
    $region62: #{tpu_custom_call.1} parent=1 // pred_check
      _
    $region63: #{tpu_custom_call.1} parent=1 // pred_check_branch
      %151 = sbr.rel (0) target = $region65
    $region64: #{tpu_custom_call.1} parent=1 // pred_region
      _
    $region65: #{tpu_custom_call.1} parent=1 // pred_fallthru
      _
    // Predicated region
    $region66: #{tpu_custom_call.1} parent=1 // pred_check
      _
    $region67: #{tpu_custom_call.1} parent=1 // pred_check_branch
      %153 = sbr.rel (0) target = $region69
    $region68: #{tpu_custom_call.1} parent=1 // pred_region
      %154 = dma.done [#allocation3], 256
    $region69: #{tpu_custom_call.1} parent=1 // pred_fallthru
      _
    // Predicated region
    $region70: #{tpu_custom_call.1} parent=1 // pred_check
      _
    $region71: #{tpu_custom_call.1} parent=1 // pred_check_branch
      %156 = sbr.rel (0) target = $region73
    $region72: #{tpu_custom_call.1} parent=1 // pred_region
      %157 = dma.done [#allocation6], 256
    $region73: #{tpu_custom_call.1} parent=1 // pred_fallthru
      _
    // Predicated region
    $region74: #{tpu_custom_call.1} parent=1 // pred_check
      _
    $region75: #{tpu_custom_call.1} parent=1 // pred_check_branch
      %159 = sbr.rel (0) target = $region77
    $region76: #{tpu_custom_call.1} parent=1 // pred_region
      %160 = dma.done [#allocation6], 128
    $region77: #{tpu_custom_call.1} parent=1 // pred_fallthru
      _
    // Predicated region
    $region78: #{tpu_custom_call.1} parent=1 // pred_check
      _
    $region79: #{tpu_custom_call.1} parent=1 // pred_check_branch
      %162 = sbr.rel (0) target = $region81
    $region80: #{tpu_custom_call.1} parent=1 // pred_region
      %163 = dma.done [#allocation9], 16
    $region81: #{tpu_custom_call.1} parent=1 // pred_fallthru
      _
    // Predicated region
    $region82: #{tpu_custom_call.1} parent=1 // pred_check
      _
    $region83: #{tpu_custom_call.1} parent=1 // pred_check_branch
      %165 = sbr.rel (0) target = $region85
    $region84: #{tpu_custom_call.1} parent=1 // pred_region
      %166 = dma.done [#allocation9], 16
    $region85: #{tpu_custom_call.1} parent=1 // pred_fallthru
      _
    // Predicated region
    $region86: #{tpu_custom_call.1} parent=1 // pred_check
      _
    $region87: #{tpu_custom_call.1} parent=1 // pred_check_branch
      %168 = sbr.rel (0) target = $region89
    $region88: #{tpu_custom_call.1} parent=1 // pred_region
      %169 = dma.done [#allocation12], 512
    $region89: #{tpu_custom_call.1} parent=1 // pred_fallthru
      _
    // Predicated region
    $region90: #{tpu_custom_call.1} parent=1 // pred_check
      _
    $region91: #{tpu_custom_call.1} parent=1 // pred_check_branch
      %171 = sbr.rel (0) target = $region93
    $region92: #{tpu_custom_call.1} parent=1 // pred_region
      %172 = dma.done [#allocation12], 16
    $region93: #{tpu_custom_call.1} parent=1 // pred_fallthru
      _
    // Predicated region
    $region94: #{tpu_custom_call.1} parent=1 // pred_check
      _
    $region95: #{tpu_custom_call.1} parent=1 // pred_check_branch
      %174 = sbr.rel (0) target = $region97
    $region96: #{tpu_custom_call.1} parent=1 // pred_region
      %175 = dma.done [#allocation15], 256
    $region97: #{tpu_custom_call.1} parent=1 // pred_fallthru
      _
    // Predicated region
    $region98: #{tpu_custom_call.1} parent=1 // pred_check
      _
    $region99: #{tpu_custom_call.1} parent=1 // pred_check_branch
      %177 = sbr.rel (0) target = $region101
    $region100: #{tpu_custom_call.1} parent=1 // pred_region
      %178 = dma.done [#allocation15], 512
    $region101: #{tpu_custom_call.1} parent=1 // pred_fallthru
      _
    // Predicated region
    $region102: #{tpu_custom_call.1} parent=1 // pred_check
      _
    $region103: #{tpu_custom_call.1} parent=1 // pred_check_branch
      %180 = sbr.rel (0) target = $region105
    $region104: #{tpu_custom_call.1} parent=1 // pred_region
      %181 = dma.done [#allocation18], 512
    $region105: #{tpu_custom_call.1} parent=1 // pred_fallthru
      _
    %v182 = vld [vmem:[#allocation2] sm:$0xff]
    %v183 = vld [vmem:[#allocation2 + $0x8] sm:$0xff]
    %v184 = vld [vmem:[%s1] sm:$0xff]
    %v185 = vld [vmem:[%s1 + $0x8] sm:$0xff]
    %v186 = vld [vmem:[#allocation5] sm:$0xff]
    %v187 = vld [vmem:[#allocation5 + $0x8] sm:$0xff]
    %v188 = vld [vmem:[#allocation7] sm:$0x3f]
    %vm189 = vcmask 48128
    %v191 = vsel %vm189, %v184, 0
    %v194 = vsel %vm189, %v185, 0
    %vm196 = vcmask 1045504
    %v198 = vsel %vm196, %v188, 0
    %200 = vmatprep.subr.mxu0 0.0
    %201 = vmatpush1.msra.mxu0 0.0
    %202 = vmatprep.subr.mxu0 0.0
    %203 = vmatpush1.msra.mxu0 0.0
    %204 = vmatprep.subr.mxu0 0.0
    %205 = vmatpush1.msra.mxu0 0.0
    %206 = vmatprep.subr.mxu0 0.0
    %207 = vmatpush1.msra.mxu0 0.0
    %208 = vmatprep.subr.mxu0 0.0
    %209 = vmatpush1.msra.mxu0 0.0
    %210 = vmatprep.subr.mxu0 0.0
    %211 = vmatpush1.msra.mxu0 0.0
    %212 = vmatprep.subr.mxu0 0.0
    %213 = vmatpush1.msra.mxu0 0.0
    %214 = vmatprep.subr.mxu0 0.0
    %215 = vmatpush1.msra.mxu0 0.0
    %216 = vmatprep.subr.mxu0 0.0
    %217 = vmatpush1.msra.mxu0 0.0
    %218 = vmatprep.subr.mxu0 0.0
    %219 = vmatpush1.msra.mxu0 0.0
    %220 = vmatprep.subr.mxu0 0.0
    %221 = vmatpush1.msra.mxu0 0.0
    %222 = vmatprep.subr.mxu0 0.0
    %223 = vmatpush1.msra.mxu0 0.0
    %224 = vmatprep.subr.mxu0 0.0
    %225 = vmatpush1.msra.mxu0 0.0
    %226 = vmatprep.subr.mxu0 0.0
    %227 = vmatpush1.msra.mxu0 0.0
    %228 = vmatprep.subr.mxu0 0.0
    %229 = vmatpush1.msra.mxu0 0.0
    %230 = vmatprep.subr.mxu0 0.0
    %231 = vmatpush1.msra.mxu0 %v198
    %232 = vmatprep.subr.mxu0 0.0
    %233 = vmatpush2.msra.mxu0 0.0
    %234 = vmatprep.subr.mxu0 0.0
    %235 = vmatpush2.msra.mxu0 0.0
    %236 = vmatprep.subr.mxu0 0.0
    %237 = vmatpush2.msra.mxu0 0.0
    %238 = vmatprep.subr.mxu0 0.0
    %239 = vmatpush2.msra.mxu0 0.0
    %240 = vmatprep.subr.mxu0 0.0
    %241 = vmatpush2.msra.mxu0 0.0
    %242 = vmatprep.subr.mxu0 0.0
    %243 = vmatpush2.msra.mxu0 0.0
    %244 = vmatprep.subr.mxu0 0.0
    %245 = vmatpush2.msra.mxu0 0.0
    %246 = vmatprep.subr.mxu0 0.0
    %247 = vmatpush2.msra.mxu0 0.0
    %248 = vmatprep.subr.mxu0 0.0
    %249 = vmatpush2.msra.mxu0 0.0
    %250 = vmatprep.subr.mxu0 0.0
    %251 = vmatpush2.msra.mxu0 0.0
    %252 = vmatprep.subr.mxu0 0.0
    %253 = vmatpush2.msra.mxu0 0.0
    %254 = vmatprep.subr.mxu0 0.0
    %255 = vmatpush2.msra.mxu0 0.0
    %256 = vmatprep.subr.mxu0 0.0
    %257 = vmatpush2.msra.mxu0 0.0
    %258 = vmatprep.subr.mxu0 0.0
    %259 = vmatpush2.msra.mxu0 0.0
    %260 = vmatprep.subr.mxu0 0.0
    %261 = vmatpush2.msra.mxu0 0.0
    %262 = vmatprep.subr.mxu0 0.0
    %263 = vmatpush2.msra.mxu0 0.0
    %264 = vmatprep.mubr.f32.mxu0 0.0
    %265 = vmatmul.mubr.f32.gmra.mxu0 %v191
    %v266 = vpop.f32.mrf.mxu0
    %v267 = vadd.f32 0.0, %v266
    %v268 = vpop.f32.mrf.mxu0
    %269 = vmatprep.mubr.f32.mxu0 0.0
    %270 = vmatmul.mubr.f32.gmra.mxu0 %v194
    %v271 = vpop.f32.mrf.mxu0
    %v272 = vadd.f32 0.0, %v271
    %v273 = vpop.f32.mrf.mxu0
    %274 = vdwg.mxu0
    %vm275 = vcmask 130048
    %v277 = vsel %vm275, %v182, 0
    %v280 = vsel %vm275, %v183, 0
    %282 = vmatprep.subr.mxu0 0.0
    %283 = vmatpush1.msra.mxu0 0.0
    %284 = vmatprep.subr.mxu0 0.0
    %285 = vmatpush1.msra.mxu0 0.0
    %286 = vmatprep.subr.mxu0 0.0
    %287 = vmatpush1.msra.mxu0 0.0
    %288 = vmatprep.subr.mxu0 0.0
    %289 = vmatpush1.msra.mxu0 0.0
    %290 = vmatprep.subr.mxu0 0.0
    %291 = vmatpush1.msra.mxu0 0.0
    %292 = vmatprep.subr.mxu0 0.0
    %293 = vmatpush1.msra.mxu0 0.0
    %294 = vmatprep.subr.mxu0 0.0
    %295 = vmatpush1.msra.mxu0 0.0
    %296 = vmatprep.subr.mxu0 0.0
    %297 = vmatpush1.msra.mxu0 0.0
    %298 = vmatprep.subr.mxu0 0.0
    %299 = vmatpush1.msra.mxu0 0.0
    %300 = vmatprep.subr.mxu0 0.0
    %301 = vmatpush1.msra.mxu0 0.0
    %302 = vmatprep.subr.mxu0 0.0
    %303 = vmatpush1.msra.mxu0 0.0
    %304 = vmatprep.subr.mxu0 0.0
    %305 = vmatpush1.msra.mxu0 0.0
    %306 = vmatprep.subr.mxu0 0.0
    %307 = vmatpush1.msra.mxu0 0.0
    %308 = vmatprep.subr.mxu0 0.0
    %309 = vmatpush1.msra.mxu0 0.0
    %310 = vmatprep.subr.mxu0 0.0
    %311 = vmatpush1.msra.mxu0 %v187
    %312 = vmatprep.subr.mxu0 0.0
    %313 = vmatpush1.msra.mxu0 %v186
    %314 = vmatprep.subr.mxu0 0.0
    %315 = vmatpush2.msra.mxu0 0.0
    %316 = vmatprep.subr.mxu0 0.0
    %317 = vmatpush2.msra.mxu0 0.0
    %318 = vmatprep.subr.mxu0 0.0
    %319 = vmatpush2.msra.mxu0 0.0
    %320 = vmatprep.subr.mxu0 0.0
    %321 = vmatpush2.msra.mxu0 0.0
    %322 = vmatprep.subr.mxu0 0.0
    %323 = vmatpush2.msra.mxu0 0.0
    %324 = vmatprep.subr.mxu0 0.0
    %325 = vmatpush2.msra.mxu0 0.0
    %326 = vmatprep.subr.mxu0 0.0
    %327 = vmatpush2.msra.mxu0 0.0
    %328 = vmatprep.subr.mxu0 0.0
    %329 = vmatpush2.msra.mxu0 0.0
    %330 = vmatprep.subr.mxu0 0.0
    %331 = vmatpush2.msra.mxu0 0.0
    %332 = vmatprep.subr.mxu0 0.0
    %333 = vmatpush2.msra.mxu0 0.0
    %334 = vmatprep.subr.mxu0 0.0
    %335 = vmatpush2.msra.mxu0 0.0
    %336 = vmatprep.subr.mxu0 0.0
    %337 = vmatpush2.msra.mxu0 0.0
    %338 = vmatprep.subr.mxu0 0.0
    %339 = vmatpush2.msra.mxu0 0.0
    %340 = vmatprep.subr.mxu0 0.0
    %341 = vmatpush2.msra.mxu0 0.0
    %342 = vmatprep.subr.mxu0 0.0
    %343 = vmatpush2.msra.mxu0 0.0
    %344 = vmatprep.subr.mxu0 0.0
    %345 = vmatpush2.msra.mxu0 0.0
    %346 = vmatprep.mubr.f32.mxu0 0.0
    %347 = vmatmul.mubr.f32.gmra.mxu0 %v277
    %v348 = vpop.f32.mrf.mxu0
    %v349 = vadd.f32 %v267, %v348
    %v350 = vpop.f32.mrf.mxu0
    %351 = vmatprep.mubr.f32.mxu0 0.0
    %352 = vmatmul.mubr.f32.gmra.mxu0 %v280
    %v353 = vpop.f32.mrf.mxu0
    %v354 = vadd.f32 %v272, %v353
    %v355 = vpop.f32.mrf.mxu0
    %356 = vdwg.mxu0
    %v357 = vld [vmem:[#allocation8] sm:$0x1]
    %v359 = vlaneseq
    %v360 = vshrl.u32 %v359, 7
    %v361 = vsub.s32 0, %v360
    %v362 = vrot.slane %v357, %v361
    %v364 = vadd.f32 %v349, %v362
    %v365 = vadd.f32 %v354, %v362
    %v366 = vmax.f32 %v364, 0.0
    %v367 = vmax.f32 %v365, 0.0
    %v368 = vld [vmem:[%s5] sm:$0xff]
    %v369 = vld [vmem:[%s5 + $0x8] sm:$0xff]
    %v370 = vld [vmem:[%s5 + $0x10] sm:$0xff]
    %v371 = vld [vmem:[%s5 + $0x18] sm:$0xff]
    %v372 = vld [vmem:[#allocation10] sm:$0x1]
    %v374 = vlaneseq
    %v375 = vshrl.u32 %v374, 7
    %v376 = vsub.s32 0, %v375
    %v377 = vrot.slane %v372, %v376
    %vm379 = vcmask 261120
    %v381 = vsel %vm379, %v366, 0
    %v384 = vsel %vm379, %v367, 0
    %386 = vmatprep.subr.mxu0 0.0
    %387 = vmatpush1.msra.mxu0 0.0
    %388 = vmatprep.subr.mxu0 0.0
    %389 = vmatpush1.msra.mxu0 0.0
    %390 = vmatprep.subr.mxu0 0.0
    %391 = vmatpush1.msra.mxu0 0.0
    %392 = vmatprep.subr.mxu0 0.0
    %393 = vmatpush1.msra.mxu0 0.0
    %394 = vmatprep.subr.mxu0 0.0
    %395 = vmatpush1.msra.mxu0 0.0
    %396 = vmatprep.subr.mxu0 0.0
    %397 = vmatpush1.msra.mxu0 0.0
    %398 = vmatprep.subr.mxu0 0.0
    %399 = vmatpush1.msra.mxu0 0.0
    %400 = vmatprep.subr.mxu0 0.0
    %401 = vmatpush1.msra.mxu0 0.0
    %402 = vmatprep.subr.mxu0 0.0
    %403 = vmatpush1.msra.mxu0 0.0
    %404 = vmatprep.subr.mxu0 0.0
    %405 = vmatpush1.msra.mxu0 0.0
    %406 = vmatprep.subr.mxu0 0.0
    %407 = vmatpush1.msra.mxu0 0.0
    %408 = vmatprep.subr.mxu0 0.0
    %409 = vmatpush1.msra.mxu0 0.0
    %410 = vmatprep.subr.mxu0 0.0
    %411 = vmatpush1.msra.mxu0 %v371
    %412 = vmatprep.subr.mxu0 0.0
    %413 = vmatpush1.msra.mxu0 %v370
    %414 = vmatprep.subr.mxu0 0.0
    %415 = vmatpush1.msra.mxu0 %v369
    %416 = vmatprep.subr.mxu0 0.0
    %417 = vmatpush1.msra.mxu0 %v368
    %418 = vmatprep.subr.mxu0 0.0
    %419 = vmatpush2.msra.mxu0 0.0
    %420 = vmatprep.subr.mxu0 0.0
    %421 = vmatpush2.msra.mxu0 0.0
    %422 = vmatprep.subr.mxu0 0.0
    %423 = vmatpush2.msra.mxu0 0.0
    %424 = vmatprep.subr.mxu0 0.0
    %425 = vmatpush2.msra.mxu0 0.0
    %426 = vmatprep.subr.mxu0 0.0
    %427 = vmatpush2.msra.mxu0 0.0
    %428 = vmatprep.subr.mxu0 0.0
    %429 = vmatpush2.msra.mxu0 0.0
    %430 = vmatprep.subr.mxu0 0.0
    %431 = vmatpush2.msra.mxu0 0.0
    %432 = vmatprep.subr.mxu0 0.0
    %433 = vmatpush2.msra.mxu0 0.0
    %434 = vmatprep.subr.mxu0 0.0
    %435 = vmatpush2.msra.mxu0 0.0
    %436 = vmatprep.subr.mxu0 0.0
    %437 = vmatpush2.msra.mxu0 0.0
    %438 = vmatprep.subr.mxu0 0.0
    %439 = vmatpush2.msra.mxu0 0.0
    %440 = vmatprep.subr.mxu0 0.0
    %441 = vmatpush2.msra.mxu0 0.0
    %442 = vmatprep.subr.mxu0 0.0
    %443 = vmatpush2.msra.mxu0 0.0
    %444 = vmatprep.subr.mxu0 0.0
    %445 = vmatpush2.msra.mxu0 0.0
    %446 = vmatprep.subr.mxu0 0.0
    %447 = vmatpush2.msra.mxu0 0.0
    %448 = vmatprep.subr.mxu0 0.0
    %449 = vmatpush2.msra.mxu0 0.0
    %450 = vmatprep.mubr.f32.mxu0 0.0
    %451 = vmatmul.mubr.f32.gmra.mxu0 %v381
    %v452 = vpop.f32.mrf.mxu0
    %v453 = vadd.f32 %v377, %v452
    %v454 = vpop.f32.mrf.mxu0
    %455 = vmatprep.mubr.f32.mxu0 0.0
    %456 = vmatmul.mubr.f32.gmra.mxu0 %v384
    %v457 = vpop.f32.mrf.mxu0
    %v458 = vadd.f32 %v377, %v457
    %v459 = vpop.f32.mrf.mxu0
    %460 = vdwg.mxu0
    %v461 = vmax.f32 %v453, 0.0
    %v462 = vmax.f32 %v458, 0.0
    %v463 = vld [vmem:[#allocation11] sm:$0xff]
    %v464 = vld [vmem:[#allocation11 + $0x8] sm:$0xff]
    %v465 = vld [vmem:[#allocation11 + $0x10] sm:$0xff]
    %v466 = vld [vmem:[#allocation11 + $0x18] sm:$0xff]
    %v467 = vld [vmem:[#allocation13] sm:$0x1]
    %v469 = vlaneseq
    %v470 = vshrl.u32 %v469, 7
    %v471 = vsub.s32 0, %v470
    %v472 = vrot.slane %v467, %v471
    %v475 = vsel %vm379, %v461, 0
    %v478 = vsel %vm379, %v462, 0
    %480 = vmatprep.subr.mxu0 0.0
    %481 = vmatpush1.msra.mxu0 0.0
    %482 = vmatprep.subr.mxu0 0.0
    %483 = vmatpush1.msra.mxu0 0.0
    %484 = vmatprep.subr.mxu0 0.0
    %485 = vmatpush1.msra.mxu0 0.0
    %486 = vmatprep.subr.mxu0 0.0
    %487 = vmatpush1.msra.mxu0 0.0
    %488 = vmatprep.subr.mxu0 0.0
    %489 = vmatpush1.msra.mxu0 0.0
    %490 = vmatprep.subr.mxu0 0.0
    %491 = vmatpush1.msra.mxu0 0.0
    %492 = vmatprep.subr.mxu0 0.0
    %493 = vmatpush1.msra.mxu0 0.0
    %494 = vmatprep.subr.mxu0 0.0
    %495 = vmatpush1.msra.mxu0 0.0
    %496 = vmatprep.subr.mxu0 0.0
    %497 = vmatpush1.msra.mxu0 0.0
    %498 = vmatprep.subr.mxu0 0.0
    %499 = vmatpush1.msra.mxu0 0.0
    %500 = vmatprep.subr.mxu0 0.0
    %501 = vmatpush1.msra.mxu0 0.0
    %502 = vmatprep.subr.mxu0 0.0
    %503 = vmatpush1.msra.mxu0 0.0
    %504 = vmatprep.subr.mxu0 0.0
    %505 = vmatpush1.msra.mxu0 %v466
    %506 = vmatprep.subr.mxu0 0.0
    %507 = vmatpush1.msra.mxu0 %v465
    %508 = vmatprep.subr.mxu0 0.0
    %509 = vmatpush1.msra.mxu0 %v464
    %510 = vmatprep.subr.mxu0 0.0
    %511 = vmatpush1.msra.mxu0 %v463
    %512 = vmatprep.subr.mxu0 0.0
    %513 = vmatpush2.msra.mxu0 0.0
    %514 = vmatprep.subr.mxu0 0.0
    %515 = vmatpush2.msra.mxu0 0.0
    %516 = vmatprep.subr.mxu0 0.0
    %517 = vmatpush2.msra.mxu0 0.0
    %518 = vmatprep.subr.mxu0 0.0
    %519 = vmatpush2.msra.mxu0 0.0
    %520 = vmatprep.subr.mxu0 0.0
    %521 = vmatpush2.msra.mxu0 0.0
    %522 = vmatprep.subr.mxu0 0.0
    %523 = vmatpush2.msra.mxu0 0.0
    %524 = vmatprep.subr.mxu0 0.0
    %525 = vmatpush2.msra.mxu0 0.0
    %526 = vmatprep.subr.mxu0 0.0
    %527 = vmatpush2.msra.mxu0 0.0
    %528 = vmatprep.subr.mxu0 0.0
    %529 = vmatpush2.msra.mxu0 0.0
    %530 = vmatprep.subr.mxu0 0.0
    %531 = vmatpush2.msra.mxu0 0.0
    %532 = vmatprep.subr.mxu0 0.0
    %533 = vmatpush2.msra.mxu0 0.0
    %534 = vmatprep.subr.mxu0 0.0
    %535 = vmatpush2.msra.mxu0 0.0
    %536 = vmatprep.subr.mxu0 0.0
    %537 = vmatpush2.msra.mxu0 0.0
    %538 = vmatprep.subr.mxu0 0.0
    %539 = vmatpush2.msra.mxu0 0.0
    %540 = vmatprep.subr.mxu0 0.0
    %541 = vmatpush2.msra.mxu0 0.0
    %542 = vmatprep.subr.mxu0 0.0
    %543 = vmatpush2.msra.mxu0 0.0
    %544 = vmatprep.mubr.f32.mxu0 0.0
    %545 = vmatmul.mubr.f32.gmra.mxu0 %v475
    %v546 = vpop.f32.mrf.mxu0
    %v547 = vadd.f32 %v472, %v546
    %v548 = vpop.f32.mrf.mxu0
    %549 = vmatprep.mubr.f32.mxu0 0.0
    %550 = vmatmul.mubr.f32.gmra.mxu0 %v478
    %v551 = vpop.f32.mrf.mxu0
    %v552 = vadd.f32 %v472, %v551
    %v553 = vpop.f32.mrf.mxu0
    %554 = vdwg.mxu0
    %v555 = vld [vmem:[#allocation14] sm:$0xff]
    %v556 = vld [vmem:[#allocation14 + $0x8] sm:$0xff]
    %v557 = vld [vmem:[%s10] sm:$0x3f]
    %v559 = vsel %vm196, %v557, 0
    %561 = vmatprep.subr.mxu0 0.0
    %562 = vmatpush1.msra.mxu0 0.0
    %563 = vmatprep.subr.mxu0 0.0
    %564 = vmatpush1.msra.mxu0 0.0
    %565 = vmatprep.subr.mxu0 0.0
    %566 = vmatpush1.msra.mxu0 0.0
    %567 = vmatprep.subr.mxu0 0.0
    %568 = vmatpush1.msra.mxu0 0.0
    %569 = vmatprep.subr.mxu0 0.0
    %570 = vmatpush1.msra.mxu0 0.0
    %571 = vmatprep.subr.mxu0 0.0
    %572 = vmatpush1.msra.mxu0 0.0
    %573 = vmatprep.subr.mxu0 0.0
    %574 = vmatpush1.msra.mxu0 0.0
    %575 = vmatprep.subr.mxu0 0.0
    %576 = vmatpush1.msra.mxu0 0.0
    %577 = vmatprep.subr.mxu0 0.0
    %578 = vmatpush1.msra.mxu0 0.0
    %579 = vmatprep.subr.mxu0 0.0
    %580 = vmatpush1.msra.mxu0 0.0
    %581 = vmatprep.subr.mxu0 0.0
    %582 = vmatpush1.msra.mxu0 0.0
    %583 = vmatprep.subr.mxu0 0.0
    %584 = vmatpush1.msra.mxu0 0.0
    %585 = vmatprep.subr.mxu0 0.0
    %586 = vmatpush1.msra.mxu0 0.0
    %587 = vmatprep.subr.mxu0 0.0
    %588 = vmatpush1.msra.mxu0 0.0
    %589 = vmatprep.subr.mxu0 0.0
    %590 = vmatpush1.msra.mxu0 0.0
    %591 = vmatprep.subr.mxu0 0.0
    %592 = vmatpush1.msra.mxu0 %v559
    %593 = vmatprep.subr.mxu0 0.0
    %594 = vmatpush2.msra.mxu0 0.0
    %595 = vmatprep.subr.mxu0 0.0
    %596 = vmatpush2.msra.mxu0 0.0
    %597 = vmatprep.subr.mxu0 0.0
    %598 = vmatpush2.msra.mxu0 0.0
    %599 = vmatprep.subr.mxu0 0.0
    %600 = vmatpush2.msra.mxu0 0.0
    %601 = vmatprep.subr.mxu0 0.0
    %602 = vmatpush2.msra.mxu0 0.0
    %603 = vmatprep.subr.mxu0 0.0
    %604 = vmatpush2.msra.mxu0 0.0
    %605 = vmatprep.subr.mxu0 0.0
    %606 = vmatpush2.msra.mxu0 0.0
    %607 = vmatprep.subr.mxu0 0.0
    %608 = vmatpush2.msra.mxu0 0.0
    %609 = vmatprep.subr.mxu0 0.0
    %610 = vmatpush2.msra.mxu0 0.0
    %611 = vmatprep.subr.mxu0 0.0
    %612 = vmatpush2.msra.mxu0 0.0
    %613 = vmatprep.subr.mxu0 0.0
    %614 = vmatpush2.msra.mxu0 0.0
    %615 = vmatprep.subr.mxu0 0.0
    %616 = vmatpush2.msra.mxu0 0.0
    %617 = vmatprep.subr.mxu0 0.0
    %618 = vmatpush2.msra.mxu0 0.0
    %619 = vmatprep.subr.mxu0 0.0
    %620 = vmatpush2.msra.mxu0 0.0
    %621 = vmatprep.subr.mxu0 0.0
    %622 = vmatpush2.msra.mxu0 0.0
    %623 = vmatprep.subr.mxu0 0.0
    %624 = vmatpush2.msra.mxu0 0.0
    %625 = vmatprep.mubr.f32.mxu0 0.0
    %626 = vmatmul.mubr.f32.gmra.mxu0 %v191
    %v627 = vpop.f32.mrf.mxu0
    %v628 = vadd.f32 0.0, %v627
    %v629 = vpop.f32.mrf.mxu0
    %630 = vmatprep.mubr.f32.mxu0 0.0
    %631 = vmatmul.mubr.f32.gmra.mxu0 %v194
    %v632 = vpop.f32.mrf.mxu0
    %v633 = vadd.f32 0.0, %v632
    %v634 = vpop.f32.mrf.mxu0
    %635 = vdwg.mxu0
    %636 = vmatprep.subr.mxu0 0.0
    %637 = vmatpush1.msra.mxu0 0.0
    %638 = vmatprep.subr.mxu0 0.0
    %639 = vmatpush1.msra.mxu0 0.0
    %640 = vmatprep.subr.mxu0 0.0
    %641 = vmatpush1.msra.mxu0 0.0
    %642 = vmatprep.subr.mxu0 0.0
    %643 = vmatpush1.msra.mxu0 0.0
    %644 = vmatprep.subr.mxu0 0.0
    %645 = vmatpush1.msra.mxu0 0.0
    %646 = vmatprep.subr.mxu0 0.0
    %647 = vmatpush1.msra.mxu0 0.0
    %648 = vmatprep.subr.mxu0 0.0
    %649 = vmatpush1.msra.mxu0 0.0
    %650 = vmatprep.subr.mxu0 0.0
    %651 = vmatpush1.msra.mxu0 0.0
    %652 = vmatprep.subr.mxu0 0.0
    %653 = vmatpush1.msra.mxu0 0.0
    %654 = vmatprep.subr.mxu0 0.0
    %655 = vmatpush1.msra.mxu0 0.0
    %656 = vmatprep.subr.mxu0 0.0
    %657 = vmatpush1.msra.mxu0 0.0
    %658 = vmatprep.subr.mxu0 0.0
    %659 = vmatpush1.msra.mxu0 0.0
    %660 = vmatprep.subr.mxu0 0.0
    %661 = vmatpush1.msra.mxu0 0.0
    %662 = vmatprep.subr.mxu0 0.0
    %663 = vmatpush1.msra.mxu0 0.0
    %664 = vmatprep.subr.mxu0 0.0
    %665 = vmatpush1.msra.mxu0 %v556
    %666 = vmatprep.subr.mxu0 0.0
    %667 = vmatpush1.msra.mxu0 %v555
    %668 = vmatprep.subr.mxu0 0.0
    %669 = vmatpush2.msra.mxu0 0.0
    %670 = vmatprep.subr.mxu0 0.0
    %671 = vmatpush2.msra.mxu0 0.0
    %672 = vmatprep.subr.mxu0 0.0
    %673 = vmatpush2.msra.mxu0 0.0
    %674 = vmatprep.subr.mxu0 0.0
    %675 = vmatpush2.msra.mxu0 0.0
    %676 = vmatprep.subr.mxu0 0.0
    %677 = vmatpush2.msra.mxu0 0.0
    %678 = vmatprep.subr.mxu0 0.0
    %679 = vmatpush2.msra.mxu0 0.0
    %680 = vmatprep.subr.mxu0 0.0
    %681 = vmatpush2.msra.mxu0 0.0
    %682 = vmatprep.subr.mxu0 0.0
    %683 = vmatpush2.msra.mxu0 0.0
    %684 = vmatprep.subr.mxu0 0.0
    %685 = vmatpush2.msra.mxu0 0.0
    %686 = vmatprep.subr.mxu0 0.0
    %687 = vmatpush2.msra.mxu0 0.0
    %688 = vmatprep.subr.mxu0 0.0
    %689 = vmatpush2.msra.mxu0 0.0
    %690 = vmatprep.subr.mxu0 0.0
    %691 = vmatpush2.msra.mxu0 0.0
    %692 = vmatprep.subr.mxu0 0.0
    %693 = vmatpush2.msra.mxu0 0.0
    %694 = vmatprep.subr.mxu0 0.0
    %695 = vmatpush2.msra.mxu0 0.0
    %696 = vmatprep.subr.mxu0 0.0
    %697 = vmatpush2.msra.mxu0 0.0
    %698 = vmatprep.subr.mxu0 0.0
    %699 = vmatpush2.msra.mxu0 0.0
    %700 = vmatprep.mubr.f32.mxu0 0.0
    %701 = vmatmul.mubr.f32.gmra.mxu0 %v277
    %v702 = vpop.f32.mrf.mxu0
    %v703 = vadd.f32 %v628, %v702
    %v704 = vpop.f32.mrf.mxu0
    %705 = vmatprep.mubr.f32.mxu0 0.0
    %706 = vmatmul.mubr.f32.gmra.mxu0 %v280
    %v707 = vpop.f32.mrf.mxu0
    %v708 = vadd.f32 %v633, %v707
    %v709 = vpop.f32.mrf.mxu0
    %710 = vdwg.mxu0
    %v711 = vld [vmem:[%s11] sm:$0x1]
    %v713 = vlaneseq
    %v714 = vshrl.u32 %v713, 7
    %v715 = vsub.s32 0, %v714
    %v716 = vrot.slane %v711, %v715
    %v718 = vadd.f32 %v703, %v716
    %v719 = vadd.f32 %v708, %v716
    %v720 = vmax.f32 %v718, 0.0
    %v721 = vmax.f32 %v719, 0.0
    %v722 = vld [vmem:[#allocation16] sm:$0xff]
    %v723 = vld [vmem:[#allocation16 + $0x8] sm:$0xff]
    %v724 = vld [vmem:[#allocation16 + $0x10] sm:$0xff]
    %v725 = vld [vmem:[#allocation16 + $0x18] sm:$0xff]
    %v726 = vld [vmem:[%s13] sm:$0x1]
    %v728 = vlaneseq
    %v729 = vshrl.u32 %v728, 7
    %v730 = vsub.s32 0, %v729
    %v731 = vrot.slane %v726, %v730
    %v734 = vsel %vm379, %v720, 0
    %v737 = vsel %vm379, %v721, 0
    %739 = vmatprep.subr.mxu0 0.0
    %740 = vmatpush1.msra.mxu0 0.0
    %741 = vmatprep.subr.mxu0 0.0
    %742 = vmatpush1.msra.mxu0 0.0
    %743 = vmatprep.subr.mxu0 0.0
    %744 = vmatpush1.msra.mxu0 0.0
    %745 = vmatprep.subr.mxu0 0.0
    %746 = vmatpush1.msra.mxu0 0.0
    %747 = vmatprep.subr.mxu0 0.0
    %748 = vmatpush1.msra.mxu0 0.0
    %749 = vmatprep.subr.mxu0 0.0
    %750 = vmatpush1.msra.mxu0 0.0
    %751 = vmatprep.subr.mxu0 0.0
    %752 = vmatpush1.msra.mxu0 0.0
    %753 = vmatprep.subr.mxu0 0.0
    %754 = vmatpush1.msra.mxu0 0.0
    %755 = vmatprep.subr.mxu0 0.0
    %756 = vmatpush1.msra.mxu0 0.0
    %757 = vmatprep.subr.mxu0 0.0
    %758 = vmatpush1.msra.mxu0 0.0
    %759 = vmatprep.subr.mxu0 0.0
    %760 = vmatpush1.msra.mxu0 0.0
    %761 = vmatprep.subr.mxu0 0.0
    %762 = vmatpush1.msra.mxu0 0.0
    %763 = vmatprep.subr.mxu0 0.0
    %764 = vmatpush1.msra.mxu0 %v725
    %765 = vmatprep.subr.mxu0 0.0
    %766 = vmatpush1.msra.mxu0 %v724
    %767 = vmatprep.subr.mxu0 0.0
    %768 = vmatpush1.msra.mxu0 %v723
    %769 = vmatprep.subr.mxu0 0.0
    %770 = vmatpush1.msra.mxu0 %v722
    %771 = vmatprep.subr.mxu0 0.0
    %772 = vmatpush2.msra.mxu0 0.0
    %773 = vmatprep.subr.mxu0 0.0
    %774 = vmatpush2.msra.mxu0 0.0
    %775 = vmatprep.subr.mxu0 0.0
    %776 = vmatpush2.msra.mxu0 0.0
    %777 = vmatprep.subr.mxu0 0.0
    %778 = vmatpush2.msra.mxu0 0.0
    %779 = vmatprep.subr.mxu0 0.0
    %780 = vmatpush2.msra.mxu0 0.0
    %781 = vmatprep.subr.mxu0 0.0
    %782 = vmatpush2.msra.mxu0 0.0
    %783 = vmatprep.subr.mxu0 0.0
    %784 = vmatpush2.msra.mxu0 0.0
    %785 = vmatprep.subr.mxu0 0.0
    %786 = vmatpush2.msra.mxu0 0.0
    %787 = vmatprep.subr.mxu0 0.0
    %788 = vmatpush2.msra.mxu0 0.0
    %789 = vmatprep.subr.mxu0 0.0
    %790 = vmatpush2.msra.mxu0 0.0
    %791 = vmatprep.subr.mxu0 0.0
    %792 = vmatpush2.msra.mxu0 0.0
    %793 = vmatprep.subr.mxu0 0.0
    %794 = vmatpush2.msra.mxu0 0.0
    %795 = vmatprep.subr.mxu0 0.0
    %796 = vmatpush2.msra.mxu0 0.0
    %797 = vmatprep.subr.mxu0 0.0
    %798 = vmatpush2.msra.mxu0 0.0
    %799 = vmatprep.subr.mxu0 0.0
    %800 = vmatpush2.msra.mxu0 0.0
    %801 = vmatprep.subr.mxu0 0.0
    %802 = vmatpush2.msra.mxu0 0.0
    %803 = vmatprep.mubr.f32.mxu0 0.0
    %804 = vmatmul.mubr.f32.gmra.mxu0 %v734
    %v805 = vpop.f32.mrf.mxu0
    %v806 = vadd.f32 %v731, %v805
    %v807 = vpop.f32.mrf.mxu0
    %808 = vmatprep.mubr.f32.mxu0 0.0
    %809 = vmatmul.mubr.f32.gmra.mxu0 %v737
    %v810 = vpop.f32.mrf.mxu0
    %v811 = vadd.f32 %v731, %v810
    %v812 = vpop.f32.mrf.mxu0
    %813 = vdwg.mxu0
    %v814 = vmax.f32 %v806, 0.0
    %v815 = vmax.f32 %v811, 0.0
    %v816 = vld [vmem:[#allocation17] sm:$0xff]
    %v817 = vld [vmem:[#allocation17 + $0x8] sm:$0xff]
    %v818 = vld [vmem:[#allocation17 + $0x10] sm:$0xff]
    %v819 = vld [vmem:[#allocation17 + $0x18] sm:$0xff]
    %v820 = vld [vmem:[%s15] sm:$0x1]
    %v822 = vlaneseq
    %v823 = vshrl.u32 %v822, 7
    %v824 = vsub.s32 0, %v823
    %v825 = vrot.slane %v820, %v824
    %v828 = vsel %vm379, %v814, 0
    %v831 = vsel %vm379, %v815, 0
    %833 = vmatprep.subr.mxu0 0.0
    %834 = vmatpush1.msra.mxu0 0.0
    %835 = vmatprep.subr.mxu0 0.0
    %836 = vmatpush1.msra.mxu0 0.0
    %837 = vmatprep.subr.mxu0 0.0
    %838 = vmatpush1.msra.mxu0 0.0
    %839 = vmatprep.subr.mxu0 0.0
    %840 = vmatpush1.msra.mxu0 0.0
    %841 = vmatprep.subr.mxu0 0.0
    %842 = vmatpush1.msra.mxu0 0.0
    %843 = vmatprep.subr.mxu0 0.0
    %844 = vmatpush1.msra.mxu0 0.0
    %845 = vmatprep.subr.mxu0 0.0
    %846 = vmatpush1.msra.mxu0 0.0
    %847 = vmatprep.subr.mxu0 0.0
    %848 = vmatpush1.msra.mxu0 0.0
    %849 = vmatprep.subr.mxu0 0.0
    %850 = vmatpush1.msra.mxu0 0.0
    %851 = vmatprep.subr.mxu0 0.0
    %852 = vmatpush1.msra.mxu0 0.0
    %853 = vmatprep.subr.mxu0 0.0
    %854 = vmatpush1.msra.mxu0 0.0
    %855 = vmatprep.subr.mxu0 0.0
    %856 = vmatpush1.msra.mxu0 0.0
    %857 = vmatprep.subr.mxu0 0.0
    %858 = vmatpush1.msra.mxu0 %v819
    %859 = vmatprep.subr.mxu0 0.0
    %860 = vmatpush1.msra.mxu0 %v818
    %861 = vmatprep.subr.mxu0 0.0
    %862 = vmatpush1.msra.mxu0 %v817
    %863 = vmatprep.subr.mxu0 0.0
    %864 = vmatpush1.msra.mxu0 %v816
    %865 = vmatprep.subr.mxu0 0.0
    %866 = vmatpush2.msra.mxu0 0.0
    %867 = vmatprep.subr.mxu0 0.0
    %868 = vmatpush2.msra.mxu0 0.0
    %869 = vmatprep.subr.mxu0 0.0
    %870 = vmatpush2.msra.mxu0 0.0
    %871 = vmatprep.subr.mxu0 0.0
    %872 = vmatpush2.msra.mxu0 0.0
    %873 = vmatprep.subr.mxu0 0.0
    %874 = vmatpush2.msra.mxu0 0.0
    %875 = vmatprep.subr.mxu0 0.0
    %876 = vmatpush2.msra.mxu0 0.0
    %877 = vmatprep.subr.mxu0 0.0
    %878 = vmatpush2.msra.mxu0 0.0
    %879 = vmatprep.subr.mxu0 0.0
    %880 = vmatpush2.msra.mxu0 0.0
    %881 = vmatprep.subr.mxu0 0.0
    %882 = vmatpush2.msra.mxu0 0.0
    %883 = vmatprep.subr.mxu0 0.0
    %884 = vmatpush2.msra.mxu0 0.0
    %885 = vmatprep.subr.mxu0 0.0
    %886 = vmatpush2.msra.mxu0 0.0
    %887 = vmatprep.subr.mxu0 0.0
    %888 = vmatpush2.msra.mxu0 0.0
    %889 = vmatprep.subr.mxu0 0.0
    %890 = vmatpush2.msra.mxu0 0.0
    %891 = vmatprep.subr.mxu0 0.0
    %892 = vmatpush2.msra.mxu0 0.0
    %893 = vmatprep.subr.mxu0 0.0
    %894 = vmatpush2.msra.mxu0 0.0
    %895 = vmatprep.subr.mxu0 0.0
    %896 = vmatpush2.msra.mxu0 0.0
    %897 = vmatprep.mubr.f32.mxu0 0.0
    %898 = vmatmul.mubr.f32.gmra.mxu0 %v828
    %v899 = vpop.f32.mrf.mxu0
    %v900 = vadd.f32 %v825, %v899
    %v901 = vpop.f32.mrf.mxu0
    %902 = vmatprep.mubr.f32.mxu0 0.0
    %903 = vmatmul.mubr.f32.gmra.mxu0 %v831
    %v904 = vpop.f32.mrf.mxu0
    %v905 = vadd.f32 %v825, %v904
    %v906 = vpop.f32.mrf.mxu0
    %907 = vdwg.mxu0
    %v908 = vmin.f32 %v547, %v900
    %v909 = vmin.f32 %v552, %v905
    %910 = vst [vmem:[#allocation19] sm:$0xff] %v908
    %911 = vst [vmem:[#allocation19 + $0x8] sm:$0xff] %v909
    // Predicated region
    $region106: #{tpu_custom_call.1} parent=1 // pred_check
      _
    $region107: #{tpu_custom_call.1} parent=1 // pred_check_branch
      %913 = sbr.rel (0) target = $region109
    $region108: #{tpu_custom_call.1} parent=1 // pred_region
      %s915 = ssub.s32 256, 256
      %916 = vsyncadd [#allocation4], %s915
      %s917 = sshll.u32 [#allocation19], 4
      %s918 = int_to_ptr.vmem [resolvable:$true] %s917
      %923 = dma.vmem_to_hbm [thread:$0]  %s918, 256, %s16, [#allocation4], 128, 128, 8
    $region109: #{tpu_custom_call.1} parent=1 // pred_fallthru
      _
    // Predicated region
    $region110: #{tpu_custom_call.1} parent=1 // pred_check
      _
    $region111: #{tpu_custom_call.1} parent=1 // pred_check_branch
      %925 = sbr.rel (0) target = $region113
    $region112: #{tpu_custom_call.1} parent=1 // pred_region
      %926 = dma.done [#allocation4], 256
    $region113: #{tpu_custom_call.1} parent=1 // pred_fallthru
      _
    %927 = vsyncpa [#allocation3], 1
    %928 = vsyncpa [#allocation6], 1
    %929 = vsyncpa [#allocation9], 1
    %930 = vsyncpa [#allocation12], 1
    %931 = vsyncpa [#allocation15], 1
    %932 = vsyncpa [#allocation18], 1
    %933 = vsyncpa [#allocation4], 1

</llo_original>
